<compile_context>
chip_gen: v5e
topology: v5e:2x2
jax: 0.10.0
libtpu: 0.0.40
codegen_flags: <defaults>
</compile_context>

<pallas_src>
import functools

import jax
import jax.numpy as jnp
from jax.experimental import pallas as pl
from jax.experimental.pallas import tpu as pltpu


def _round_up(x, m):
    return (x + m - 1) // m * m


def masked_linear_kernel(x_ref, mask_ref, wt_ref, b_ref, o_ref, acc_ref):
    """Grid = (batch tiles i, out-channel tiles j, in-channel/reduction tiles k)."""
    k = pl.program_id(2)

    @pl.when(k == 0)
    def _():
        acc_ref[...] = jnp.zeros_like(acc_ref)

    # Channel mask on the VPU, fused with (and hidden under) the MXU matmul.
    x_masked = x_ref[...] * mask_ref[...]                          # (bm, bk)

    # Transpose-free matmul: wt_ref is the pre-transposed weight tile (bk, bn),
    # so no per-step XLU relayout and C_out sits on the lane axis.
    acc_ref[...] += jnp.dot(x_masked, wt_ref[...],
                            preferred_element_type=jnp.float32)    # (bm, bn)

    @pl.when(k == pl.num_programs(2) - 1)
    def _():
        o_ref[...] = (acc_ref[...] + b_ref[...]).astype(o_ref.dtype)


@functools.partial(jax.jit, static_argnames=("block_m", "block_n", "block_k"))
def masked_layer_forward(x, mask, weight, bias, *,
                         block_m=256, block_n=256, block_k=512):
    """x: (B, C_in), mask: (1, C_in) or (C_in,), weight: (C_out, C_in),
    bias: (1, C_out) or (C_out,).  Returns (B, C_out)."""
    B, C_in = x.shape
    C_out = weight.shape[0]

    mask2 = jnp.reshape(mask, (1, C_in)).astype(x.dtype)
    bias2 = jnp.reshape(bias, (1, C_out))

    # --- tile sizes: sublane-aligned batch tile, lane-dense (>=128) minor dims ---
    bm = min(block_m, _round_up(B, 8))
    bn = min(block_n, _round_up(C_out, 128))
    bk = min(block_k, _round_up(C_in, 128))

    B_p = _round_up(B, bm)
    N_p = _round_up(_round_up(C_out, 128), bn)
    K_p = _round_up(_round_up(C_in, 128), bk)

    # Zero-pad to tile boundaries: padded K columns contribute 0 to the matmul,
    # padded batch rows / output columns are sliced off at the end.
    x_p = jnp.pad(x, ((0, B_p - B), (0, K_p - C_in)))
    m_p = jnp.pad(mask2, ((0, 0), (0, K_p - C_in)))
    # Pre-transpose the weight once (one-time XLA op, not per grid step).
    wt_p = jnp.pad(weight.T, ((0, K_p - C_in), (0, N_p - C_out)))
    b_p = jnp.pad(bias2, ((0, 0), (0, N_p - C_out)))

    grid = (B_p // bm, N_p // bn, K_p // bk)

    out_p = pl.pallas_call(
        masked_linear_kernel,
        out_shape=jax.ShapeDtypeStruct((B_p, N_p), x.dtype),
        grid_spec=pltpu.PrefetchScalarGridSpec(
            num_scalar_prefetch=0,
            grid=grid,
            in_specs=[
                pl.BlockSpec((bm, bk), lambda i, j, k: (i, k)),   # x tile
                pl.BlockSpec((1, bk), lambda i, j, k: (0, k)),    # channel mask
                pl.BlockSpec((bk, bn), lambda i, j, k: (k, j)),   # W.T tile
                pl.BlockSpec((1, bn), lambda i, j, k: (0, j)),    # bias tile
            ],
            out_specs=pl.BlockSpec((bm, bn), lambda i, j, k: (i, j)),
            scratch_shapes=[pltpu.VMEM((bm, bn), jnp.float32)],   # accumulator
        ),
        compiler_params=pltpu.CompilerParams(
            dimension_semantics=("parallel", "parallel", "arbitrary")),
    )(x_p, m_p, wt_p, b_p)

    return out_p[:B, :C_out]


if __name__ == "__main__":
    # Small shapes consistent with the module: a Linear over "channels".
    batch = 8
    in_channels = 32
    out_channels = 16

    key = jax.random.PRNGKey(0)
    kx, kw, kb, km = jax.random.split(key, 4)

    x = jax.random.normal(kx, (batch, in_channels), dtype=jnp.float32)
    # Deterministic "pruning" mask: zero out a subset of input channels.
    mask = (jax.random.uniform(km, (1, in_channels)) > 0.3).astype(jnp.float32)
    # nn.Linear-style deterministic init (uniform in [-1/sqrt(fan_in), 1/sqrt(fan_in)]).
    bound = 1.0 / (in_channels ** 0.5)
    weight = jax.random.uniform(kw, (out_channels, in_channels),
                                minval=-bound, maxval=bound, dtype=jnp.float32)
    bias = jax.random.uniform(kb, (1, out_channels),
                              minval=-bound, maxval=bound, dtype=jnp.float32)

    out = masked_layer_forward(x, mask, weight, bias)
    out = jax.block_until_ready(out)

    ref = (x * mask) @ weight.T + bias
    assert out.shape == (batch, out_channels)
    assert jnp.allclose(out, ref, atol=1e-5, rtol=1e-5)

    # Second check: non-divisible batch + multiple (m, n, k) tiles to exercise
    # the padding path, the K accumulator, and tail handling.
    b2, ci2, co2 = 100, 160, 200
    k2 = jax.random.PRNGKey(1)
    k2x, k2w, k2b, k2m = jax.random.split(k2, 4)
    x2 = jax.random.normal(k2x, (b2, ci2), dtype=jnp.float32)
    mask2 = (jax.random.uniform(k2m, (1, ci2)) > 0.5).astype(jnp.float32)
    w2 = jax.random.normal(k2w, (co2, ci2), dtype=jnp.float32) * 0.05
    bias2 = jax.random.normal(k2b, (1, co2), dtype=jnp.float32) * 0.05
    out2 = jax.block_until_ready(
        masked_layer_forward(x2, mask2, w2, bias2,
                             block_m=64, block_n=128, block_k=128))
    ref2 = (x2 * mask2) @ w2.T + bias2
    assert out2.shape == (b2, co2)
    assert jnp.allclose(out2, ref2, atol=1e-4, rtol=1e-4)

    print("KERNEL_OK")
</pallas_src>

<mosaic_0001>
module attributes {stable_mosaic.version = 11 : i64} {
  func.func @masked_linear_kernel(%arg0: i32, %arg1: i32, %arg2: i32, %arg3: memref<8x128xf32, #tpu.memory_space<vmem>>, %arg4: memref<1x128xf32, #tpu.memory_space<vmem>>, %arg5: memref<128x128xf32, #tpu.memory_space<vmem>>, %arg6: memref<1x128xf32, #tpu.memory_space<vmem>>, %arg7: memref<8x128xf32, #tpu.memory_space<vmem>>, %arg8: memref<8x128xf32, #tpu.memory_space<vmem>>) attributes {dimension_semantics = [#tpu.dimension_semantics<parallel>, #tpu.dimension_semantics<parallel>, #tpu.dimension_semantics<arbitrary>], iteration_bounds = array<i64: 1, 1, 1>, scalar_prefetch = 0 : i64, scratch_operands = 1 : i64, tpu.core_type = #tpu.core_type<tc>, window_params = [{transform_indices = @transform_0, window_bounds = array<i64: 8, 128>}, {transform_indices = @transform_1, window_bounds = array<i64: 1, 128>}, {transform_indices = @transform_2, window_bounds = array<i64: 128, 128>}, {transform_indices = @transform_3, window_bounds = array<i64: 1, 128>}, {transform_indices = @transform_4, window_bounds = array<i64: 8, 128>}]} {
    %c0_i32 = arith.constant 0 : i32
    %0 = arith.cmpi eq, %arg2, %c0_i32 : i32
    %1 = arith.extui %0 : i1 to i32
    %c0_i32_0 = arith.constant 0 : i32
    %2 = arith.cmpi ne, %1, %c0_i32_0 : i32
    scf.if %2 {
      %cst_12 = arith.constant 0.000000e+00 : f32
      %15 = vector.broadcast %cst_12 : f32 to vector<8x128xf32>
      %c0_13 = arith.constant 0 : index
      %c0_14 = arith.constant 0 : index
      %16 = vector.load %arg8[%c0_13, %c0_14] : memref<8x128xf32, #tpu.memory_space<vmem>>, vector<8x128xf32>
      tpu.vector_store %arg8[%c0_13, %c0_14], %15 {strides = array<i32>} : memref<8x128xf32, #tpu.memory_space<vmem>>, vector<8x128xf32>,
    } else {
    }
    %c0 = arith.constant 0 : index
    %c0_1 = arith.constant 0 : index
    %3 = vector.load %arg3[%c0, %c0_1] : memref<8x128xf32, #tpu.memory_space<vmem>>, vector<8x128xf32>
    %c0_2 = arith.constant 0 : index
    %c0_3 = arith.constant 0 : index
    %4 = vector.load %arg4[%c0_2, %c0_3] : memref<1x128xf32, #tpu.memory_space<vmem>>, vector<1x128xf32>
    %5 = vector.broadcast %4 : vector<1x128xf32> to vector<8x128xf32>
    %6 = arith.mulf %3, %5 : vector<8x128xf32>
    %c0_4 = arith.constant 0 : index
    %c0_5 = arith.constant 0 : index
    %7 = vector.load %arg8[%c0_4, %c0_5] : memref<8x128xf32, #tpu.memory_space<vmem>>, vector<8x128xf32>
    %c0_6 = arith.constant 0 : index
    %c0_7 = arith.constant 0 : index
    %8 = vector.load %arg5[%c0_6, %c0_7] : memref<128x128xf32, #tpu.memory_space<vmem>>, vector<128x128xf32>
    %cst = arith.constant dense<0.000000e+00> : vector<8x128xf32>
    %9 = tpu.matmul %6, %8, %cst {dimension_numbers = #tpu.dot_dimension_numbers<[1], [0], [0], [1], [0, 0, 1, 1], [], []>} : vector<8x128xf32>, vector<128x128xf32>, vector<8x128xf32> -> vector<8x128xf32>
    %10 = arith.addf %7, %9 : vector<8x128xf32>
    %c0_8 = arith.constant 0 : index
    %c0_9 = arith.constant 0 : index
    %11 = vector.load %arg8[%c0_8, %c0_9] : memref<8x128xf32, #tpu.memory_space<vmem>>, vector<8x128xf32>
    tpu.vector_store %arg8[%c0_8, %c0_9], %10 {strides = array<i32>} : memref<8x128xf32, #tpu.memory_space<vmem>>, vector<8x128xf32>,
    %c0_i32_10 = arith.constant 0 : i32
    %12 = arith.cmpi eq, %arg2, %c0_i32_10 : i32
    %13 = arith.extui %12 : i1 to i32
    %c0_i32_11 = arith.constant 0 : i32
    %14 = arith.cmpi ne, %13, %c0_i32_11 : i32
    scf.if %14 {
      %c0_12 = arith.constant 0 : index
      %c0_13 = arith.constant 0 : index
      %15 = vector.load %arg8[%c0_12, %c0_13] : memref<8x128xf32, #tpu.memory_space<vmem>>, vector<8x128xf32>
      %c0_14 = arith.constant 0 : index
      %c0_15 = arith.constant 0 : index
      %16 = vector.load %arg6[%c0_14, %c0_15] : memref<1x128xf32, #tpu.memory_space<vmem>>, vector<1x128xf32>
      %17 = vector.broadcast %16 : vector<1x128xf32> to vector<8x128xf32>
      %18 = arith.addf %15, %17 : vector<8x128xf32>
      %c0_16 = arith.constant 0 : index
      %c0_17 = arith.constant 0 : index
      %19 = vector.load %arg7[%c0_16, %c0_17] : memref<8x128xf32, #tpu.memory_space<vmem>>, vector<8x128xf32>
      tpu.vector_store %arg7[%c0_16, %c0_17], %18 {strides = array<i32>} : memref<8x128xf32, #tpu.memory_space<vmem>>, vector<8x128xf32>,
    } else {
    }
    return
  }
  func.func @transform_0(%arg0: i32, %arg1: i32, %arg2: i32) -> (i32, i32) {
    %c0_i32 = arith.constant 0 : i32
    return %arg0, %arg2 : i32, i32
  }
  func.func @transform_1(%arg0: i32, %arg1: i32, %arg2: i32) -> (i32, i32) {
    %c0_i32 = arith.constant 0 : i32
    %c0_i32_0 = arith.constant 0 : i32
    return %c0_i32, %arg2 : i32, i32
  }
  func.func @transform_2(%arg0: i32, %arg1: i32, %arg2: i32) -> (i32, i32) {
    %c0_i32 = arith.constant 0 : i32
    return %arg2, %arg1 : i32, i32
  }
  func.func @transform_3(%arg0: i32, %arg1: i32, %arg2: i32) -> (i32, i32) {
    %c0_i32 = arith.constant 0 : i32
    %c0_i32_0 = arith.constant 0 : i32
    return %c0_i32, %arg1 : i32, i32
  }
  func.func @transform_4(%arg0: i32, %arg1: i32, %arg2: i32) -> (i32, i32) {
    %c0_i32 = arith.constant 0 : i32
    return %arg0, %arg1 : i32, i32
  }
}

</mosaic_0001>

<llo_original>
// kernel: masked_layer_forward.1
$region0: #{masked_layer_forward.1}
  #allocation0 [shape = 'u32[]', space=smem, size = 0x4, offset = 0x4, fixed_abs, tag = 'smem constant byte address 0x4 - core index']
  #allocation1 [shape = 'u32[72,128]{1,0:T(1,128)}', space=vmem, size = 0x9000, scoped, tag = 'internal scratch']
  #allocation2 [shape = 'f32[8,128]{1,0:T(8,128)}', space=vmem, size = 0x1000, scoped, tag = 'scratch operand']
  %s0 = inlined_call_operand.vmem [shape: f32[8,128], index: 0, kind: input, shape index: {}]
  %s1 = inlined_call_operand.vmem [shape: f32[1,128], index: 1, kind: input, shape index: {}]
  %s2 = inlined_call_operand.vmem [shape: f32[128,128], index: 2, kind: input, shape index: {}]
  %s3 = inlined_call_operand.vmem [shape: f32[1,128], index: 3, kind: input, shape index: {}]
  %s4 = inlined_call_operand.hbm [shape: f32[8,128], index: 4, kind: output, shape index: {}]
  %s5 = sld [smem:[#allocation0]]
  $region34: #{masked_layer_forward.1} parent=0
    _
  %s7 = ssub.s32 1, %s5
  %s8 = scalar_select 0, %s7, %s5
  $region1: #{masked_layer_forward.1} parent=0
    #allocation3 [shape = 'u8[4096]{0}', space=vmem, size = 0x1000, scoped, tag = 'output window, operand 0, single buffered']
    #allocation4 [shape = 's32[1]{0}', space=sflag, size = 0x4, scoped, tag = 'scoped memory for masked_layer_forward.1']
    %9 = vsyncpa [#allocation4], 0
    // Predicated region
    $region2: #{masked_layer_forward.1} parent=1 // pred_check
      _
    $region3: #{masked_layer_forward.1} parent=1 // pred_check_branch
      %11 = sbr.rel (0) target = $region5
    $region4: #{masked_layer_forward.1} parent=1 // pred_region
      _
    $region5: #{masked_layer_forward.1} parent=1 // pred_fallthru
      _
    // Predicated region
    $region6: #{masked_layer_forward.1} parent=1 // pred_check
      _
    $region7: #{masked_layer_forward.1} parent=1 // pred_check_branch
      %13 = sbr.rel (0) target = $region9
    $region8: #{masked_layer_forward.1} parent=1 // pred_region
      _
    $region9: #{masked_layer_forward.1} parent=1 // pred_fallthru
      _
    // Predicated region
    $region10: #{masked_layer_forward.1} parent=1 // pred_check
      _
    $region11: #{masked_layer_forward.1} parent=1 // pred_check_branch
      %15 = sbr.rel (0) target = $region13
    $region12: #{masked_layer_forward.1} parent=1 // pred_region
      _
    $region13: #{masked_layer_forward.1} parent=1 // pred_fallthru
      _
    // Predicated region
    $region14: #{masked_layer_forward.1} parent=1 // pred_check
      _
    $region15: #{masked_layer_forward.1} parent=1 // pred_check_branch
      %17 = sbr.rel (0) target = $region17
    $region16: #{masked_layer_forward.1} parent=1 // pred_region
      _
    $region17: #{masked_layer_forward.1} parent=1 // pred_fallthru
      _
    %p18 = scmp.eq.s32.totalorder 0, 0
    // Predicated region
    $region18: #{masked_layer_forward.1} parent=1 // pred_check
      %p19 = pneg %p18
    $region19: #{masked_layer_forward.1} parent=1 // pred_check_branch
      %21 = sbr.rel (%p19) target = $region21
    $region20: #{masked_layer_forward.1} parent=1 // pred_region
      %22 = vst [vmem:[#allocation2] sm:$0xff] 0.0
    $region21: #{masked_layer_forward.1} parent=1 // pred_fallthru
      _
    %v23 = vld [vmem:[%s0] sm:$0xff]
    %v24 = vld [vmem:[%s1] sm:$0x1]
    %v26 = vperm.slane %v24, 0
    %v28 = vmul.f32 %v23, %v26
    %v29 = vld [vmem:[#allocation2] sm:$0xff]
    %v30 = vld [vmem:[%s2] sm:$0xff]
    %v31 = vld [vmem:[%s2 + $0x8] sm:$0xff]
    %v32 = vld [vmem:[%s2 + $0x10] sm:$0xff]
    %v33 = vld [vmem:[%s2 + $0x18] sm:$0xff]
    %v34 = vld [vmem:[%s2 + $0x20] sm:$0xff]
    %v35 = vld [vmem:[%s2 + $0x28] sm:$0xff]
    %v36 = vld [vmem:[%s2 + $0x30] sm:$0xff]
    %v37 = vld [vmem:[%s2 + $0x38] sm:$0xff]
    %v38 = vld [vmem:[%s2 + $0x40] sm:$0xff]
    %v39 = vld [vmem:[%s2 + $0x48] sm:$0xff]
    %v40 = vld [vmem:[%s2 + $0x50] sm:$0xff]
    %v41 = vld [vmem:[%s2 + $0x58] sm:$0xff]
    %v42 = vld [vmem:[%s2 + $0x60] sm:$0xff]
    %v43 = vld [vmem:[%s2 + $0x68] sm:$0xff]
    %v44 = vld [vmem:[%s2 + $0x70] sm:$0xff]
    %v45 = vld [vmem:[%s2 + $0x78] sm:$0xff]
    %46 = vmatpush.msra.mxu0 %v45
    %47 = vmatpush.msra.mxu0 %v44
    %48 = vmatpush.msra.mxu0 %v43
    %49 = vmatpush.msra.mxu0 %v42
    %50 = vmatpush.msra.mxu0 %v41
    %51 = vmatpush.msra.mxu0 %v40
    %52 = vmatpush.msra.mxu0 %v39
    %53 = vmatpush.msra.mxu0 %v38
    %54 = vmatpush.msra.mxu0 %v37
    %55 = vmatpush.msra.mxu0 %v36
    %56 = vmatpush.msra.mxu0 %v35
    %57 = vmatpush.msra.mxu0 %v34
    %58 = vmatpush.msra.mxu0 %v33
    %59 = vmatpush.msra.mxu0 %v32
    %60 = vmatpush.msra.mxu0 %v31
    %61 = vmatpush.msra.mxu0 %v30
    %62 = vmatmul.f32.gmra.mxu0 %v28
    %v63 = vpop.f32.mrf.mxu0
    %v64 = vadd.f32 0.0, %v63
    %65 = vdwg.mxu0
    %v66 = vadd.f32 %v29, %v64
    %67 = vst [vmem:[#allocation2] sm:$0xff] %v66
    // Predicated region
    $region22: #{masked_layer_forward.1} parent=1 // pred_check
      %p68 = pneg %p18
    $region23: #{masked_layer_forward.1} parent=1 // pred_check_branch
      %70 = sbr.rel (%p68) target = $region25
    $region24: #{masked_layer_forward.1} parent=1 // pred_region
      %v71 = vld [vmem:[#allocation2] sm:$0xff]
      %v72 = vld [vmem:[%s3] sm:$0x1]
      %v74 = vperm.slane %v72, 0
      %v76 = vadd.f32 %v71, %v74
      %77 = vst [vmem:[#allocation3] sm:$0xff] %v76
    $region25: #{masked_layer_forward.1} parent=1 // pred_fallthru
      _
    // Predicated region
    $region26: #{masked_layer_forward.1} parent=1 // pred_check
      _
    $region27: #{masked_layer_forward.1} parent=1 // pred_check_branch
      %79 = sbr.rel (0) target = $region29
    $region28: #{masked_layer_forward.1} parent=1 // pred_region
      %81 = vsyncadd [#allocation4], 0
      %s83 = sshll.u32 [#allocation3], 4
      %s84 = int_to_ptr.vmem [resolvable:$true] %s83
      %s85 = sshll.u32 %s4, 4
      %s86 = int_to_ptr.hbm [resolvable:$true] %s85
      %88 = dma.vmem_to_hbm [thread:$0]  %s84, 128, %s86, [#allocation4]
    $region29: #{masked_layer_forward.1} parent=1 // pred_fallthru
      _
    // Predicated region
    $region30: #{masked_layer_forward.1} parent=1 // pred_check
      _
    $region31: #{masked_layer_forward.1} parent=1 // pred_check_branch
      %90 = sbr.rel (0) target = $region33
    $region32: #{masked_layer_forward.1} parent=1 // pred_region
      %92 = dma.done [#allocation4], 128
    $region33: #{masked_layer_forward.1} parent=1 // pred_fallthru
      _
    %93 = vsyncpa [#allocation4], 1

</llo_original>
